<compile_context>
chip_gen: v7x
topology: tpu7x:2x2x1
jax: 0.10.0
libtpu: 0.0.40
codegen_flags: <defaults>
</compile_context>

<pallas_src>
import functools

import jax
import jax.numpy as jnp
from jax.experimental import pallas as pl
from jax.experimental.pallas import tpu as pltpu

_LANE = 128


def _round_up(x, m):
    return ((x + m - 1) // m) * m


# ----------------------------------------------------------------------------
# Kernels
# ----------------------------------------------------------------------------
def _contrastive_kernel(o1_ref, o2_ref, t_ref, loss_ref, *, margin, pd_eps,
                        hinge_eps):
    """Single D-slab path: one (TB, D) block per batch tile."""
    # Native-dtype DMA; f32 cast on the VPU hides under the memory stall.
    o1 = o1_ref[...].astype(jnp.float32)
    o2 = o2_ref[...].astype(jnp.float32)

    # torch.nn.functional.pairwise_distance: ||x1 - x2 + eps||_2 along dim=-1.
    diff = o1 - o2 + pd_eps
    sq = diff * diff

    # Row-sum on the (otherwise idle) MXU instead of an XLU lane-reduce:
    # (TB, D) @ (D, 1) -> (TB, 1).  HIGHEST keeps ~f32 accuracy.
    ones_col = jnp.ones((sq.shape[-1], 1), dtype=jnp.float32)
    sq_col = jax.lax.dot_general(
        sq, ones_col, (((1,), (0,)), ((), ())),
        precision=jax.lax.Precision.HIGHEST,
        preferred_element_type=jnp.float32)

    # Small (TB,1)->(1,TB) relayout so sqrt / loss / store are lane-dense.
    sq_row = jnp.transpose(sq_col)
    dist = jnp.sqrt(sq_row)                                   # EUP

    t = t_ref[...]                                            # (1, TB) f32
    hinge = jnp.maximum(margin - (dist + hinge_eps), 0.0)
    loss_ref[...] = 0.5 * ((1.0 - t) * dist + t * hinge)


def _contrastive_kernel_dtiled(o1_ref, o2_ref, t_ref, loss_ref, acc_ref, *,
                               margin, pd_eps, hinge_eps, feat_dim, block_d):
    """Wide-D path: grid=(batch tiles, D tiles), accumulate sq-sums in VMEM."""
    d = pl.program_id(1)

    @pl.when(d == 0)
    def _():
        acc_ref[...] = jnp.zeros_like(acc_ref)

    o1 = o1_ref[...].astype(jnp.float32)
    o2 = o2_ref[...].astype(jnp.float32)
    diff = o1 - o2 + pd_eps
    sq = diff * diff

    if feat_dim % block_d != 0:
        # Ragged last D tile: OOB columns hold unspecified data; zero them so
        # they cannot contribute to the row sum.
        col = d * block_d + jax.lax.broadcasted_iota(jnp.int32, sq.shape, 1)
        sq = jnp.where(col < feat_dim, sq, 0.0)

    ones_col = jnp.ones((block_d, 1), dtype=jnp.float32)
    acc_ref[...] += jax.lax.dot_general(
        sq, ones_col, (((1,), (0,)), ((), ())),
        precision=jax.lax.Precision.HIGHEST,
        preferred_element_type=jnp.float32)

    @pl.when(d == pl.num_programs(1) - 1)
    def _():
        dist = jnp.sqrt(jnp.transpose(acc_ref[...]))          # (1, TB)
        t = t_ref[...]
        hinge = jnp.maximum(margin - (dist + hinge_eps), 0.0)
        loss_ref[...] = 0.5 * ((1.0 - t) * dist + t * hinge)


# ----------------------------------------------------------------------------
# Tiling / VMEM budgeting
# ----------------------------------------------------------------------------
def _vmem_budgets():
    """Returns (total input pipeline budget, scoped VMEM limit) in bytes.

    Uniform, generation-safe numbers: 2 inputs x 2 pipeline buffers of native
    data (12 MiB) plus the kernel's f32 temporaries (cast/diff/sq spill to
    VMEM when a tile spans many vregs) stay well inside v7x's 64 MiB physical
    VMEM with headroom; v5e/v6e (128 MiB physical) trivially fit the same
    numbers while the 48 MiB limit lifts v5e's 16 MiB default.  get_tpu_info
    is only used to shrink further on unexpectedly small parts.
    """
    input_budget = 12 * 1024 * 1024
    vmem_limit = 48 * 1024 * 1024
    try:
        phys = pltpu.get_tpu_info().vmem_capacity_bytes
        input_budget = min(input_budget, phys // 5)
        vmem_limit = min(vmem_limit, (phys * 3) // 4)
    except Exception:
        pass
    return input_budget, vmem_limit


def _choose_tiling(B, D, itemsize, input_budget):
    """Pick (TB, TD).  TD is None for the single-D-slab path."""
    per_buf = max(_LANE * _LANE * itemsize, input_budget // 4)  # per input per buffer
    b128 = _round_up(B, _LANE)

    # Single D-slab path: size the batch tile by bytes (no row cap).
    tb = (per_buf // max(1, D * itemsize)) // _LANE * _LANE
    if tb >= _LANE:
        tb = min(tb, b128)
        if b128 >= 2 * _LANE:
            # Keep >= 2 batch tiles so the "parallel" axis can feed both v7x
            # TensorCores (no effect on single-TC v5e/v6e).
            tb = min(tb, max(_LANE, (b128 // 2 // _LANE) * _LANE))
        return tb, None

    # Very wide feature dim: a single 128-row slab would blow the VMEM budget,
    # so also tile D (reduction axis, accumulated in VMEM scratch).
    tb = min(2 * _LANE, b128)
    td = (per_buf // max(1, tb * itemsize)) // _LANE * _LANE
    td = max(_LANE, td)
    td = min(td, _round_up(D, _LANE))
    return tb, td


# ----------------------------------------------------------------------------
# Wrapper
# ----------------------------------------------------------------------------
def contrastive_loss(output1, output2, target, margin, *, _tile_override=None):
    """Per-sample contrastive loss matching the PyTorch module body.

    output1, output2: (B, D) float arrays (passed in their native dtype)
    target:           (B,) array (any numeric / bool dtype)
    returns:          (B,) float32 per-sample loss
    """
    B, D = output1.shape
    assert output2.shape == (B, D)
    itemsize = jnp.dtype(output1.dtype).itemsize

    input_budget, vmem_limit = _vmem_budgets()
    if _tile_override is not None:
        tb, td = _tile_override
    else:
        tb, td = _choose_tiling(B, D, itemsize, input_budget)

    num_b = pl.cdiv(B, tb)

    # target in lane-dense (1, B) f32 layout (tiny).  The big (B, D) inputs are
    # NOT padded/copied: ragged boundary tiles rely on Pallas block masking
    # (each row's loss stays in its own lane; OOB output lanes are dropped).
    t_row = target.reshape(1, B).astype(jnp.float32)

    cost = pl.CostEstimate(
        flops=4 * B * D + 6 * B,
        transcendentals=B,
        bytes_accessed=2 * B * D * itemsize + 8 * B,
    )

    if td is None:
        kernel = functools.partial(
            _contrastive_kernel, margin=float(margin), pd_eps=1e-6,
            hinge_eps=1e-4)
        out = pl.pallas_call(
            kernel,
            out_shape=jax.ShapeDtypeStruct((1, B), jnp.float32),
            grid=(num_b,),
            in_specs=[
                pl.BlockSpec((tb, D), lambda i: (i, 0)),   # output1 (native dtype)
                pl.BlockSpec((tb, D), lambda i: (i, 0)),   # output2 (native dtype)
                pl.BlockSpec((1, tb), lambda i: (0, i)),   # target, lane-dense
            ],
            out_specs=pl.BlockSpec((1, tb), lambda i: (0, i)),
            compiler_params=pltpu.CompilerParams(
                dimension_semantics=("parallel",),
                vmem_limit_bytes=vmem_limit),
            cost_estimate=cost,
        )(output1, output2, t_row)
    else:
        num_d = pl.cdiv(D, td)
        kernel = functools.partial(
            _contrastive_kernel_dtiled, margin=float(margin), pd_eps=1e-6,
            hinge_eps=1e-4, feat_dim=D, block_d=td)
        out = pl.pallas_call(
            kernel,
            out_shape=jax.ShapeDtypeStruct((1, B), jnp.float32),
            grid=(num_b, num_d),                           # D (reduction) last
            in_specs=[
                pl.BlockSpec((tb, td), lambda i, d: (i, d)),
                pl.BlockSpec((tb, td), lambda i, d: (i, d)),
                pl.BlockSpec((1, tb), lambda i, d: (0, i)),
            ],
            out_specs=pl.BlockSpec((1, tb), lambda i, d: (0, i)),
            scratch_shapes=[pltpu.VMEM((tb, 1), jnp.float32)],
            compiler_params=pltpu.CompilerParams(
                dimension_semantics=("parallel", "arbitrary"),
                vmem_limit_bytes=vmem_limit),
            cost_estimate=cost,
        )(output1, output2, t_row)

    return out[0]


# ----------------------------------------------------------------------------
# Reference + tests
# ----------------------------------------------------------------------------
def _reference(output1, output2, target, margin, pd_eps=1e-6, hinge_eps=1e-4):
    diff = output1.astype(jnp.float32) - output2.astype(jnp.float32) + pd_eps
    dist = jnp.sqrt(jnp.sum(diff * diff, axis=-1))
    t = target.astype(jnp.float32)
    return 0.5 * ((1.0 - t) * dist
                  + t * jnp.maximum(margin - (dist + hinge_eps), 0.0))


def _check(name, got, want, atol, rtol):
    assert got.shape == want.shape, (name, got.shape, want.shape)
    assert bool(jnp.all(jnp.isfinite(got))), name
    assert jnp.allclose(got, want, atol=atol, rtol=rtol), (name, got, want)


if __name__ == "__main__":
    key = jax.random.PRNGKey(0)
    k1, k2, k3, k4, k5, k6 = jax.random.split(key, 6)

    # Case 1: f32, ragged batch (B=37), single-D-slab path, hinge branch active.
    B1, D1, m1 = 37, 64, 15.0
    o1 = jax.random.normal(k1, (B1, D1), dtype=jnp.float32)
    o2 = jax.random.normal(k2, (B1, D1), dtype=jnp.float32)
    t1 = jax.random.bernoulli(k3, 0.5, (B1,)).astype(jnp.int32)
    loss1 = jax.block_until_ready(contrastive_loss(o1, o2, t1, m1))
    _check("f32_ragged", loss1, _reference(o1, o2, t1, m1), atol=1e-3, rtol=1e-2)

    # Case 2: native bf16 inputs (half the HBM read traffic), multiple batch
    # tiles with a ragged tail (B=300, TB=128).
    B2, D2, m2 = 300, 256, 1.0
    a = jax.random.normal(k4, (B2, D2), dtype=jnp.float32)
    b = a + 0.1 * jax.random.normal(k5, (B2, D2), dtype=jnp.float32)
    t2 = jax.random.bernoulli(k6, 0.5, (B2,)).astype(jnp.int32)
    abf, bbf = a.astype(jnp.bfloat16), b.astype(jnp.bfloat16)
    loss2 = jax.block_until_ready(contrastive_loss(abf, bbf, t2, m2))
    _check("bf16_multi_tile", loss2, _reference(abf, bbf, t2, m2),
           atol=2e-2, rtol=2e-2)

    # Case 3: force the D-tiled accumulator path at a small shape, with a
    # ragged last D tile (300 % 128 != 0) and a ragged batch tail.
    B3, D3, m3 = 200, 300, 30.0
    o13 = jax.random.normal(k1, (B3, D3), dtype=jnp.float32)
    o23 = jax.random.normal(k2, (B3, D3), dtype=jnp.float32)
    t3 = jax.random.bernoulli(k3, 0.5, (B3,)).astype(jnp.int32)
    loss3 = jax.block_until_ready(
        contrastive_loss(o13, o23, t3, m3, _tile_override=(128, 128)))
    _check("f32_dtiled", loss3, _reference(o13, o23, t3, m3),
           atol=1e-3, rtol=1e-2)

    print("KERNEL_OK")
</pallas_src>

<mosaic_0001>
module attributes {stable_mosaic.version = 11 : i64} {
  func.func @_contrastive_kernel(%arg0: i32, %arg1: memref<128x64xf32, #tpu.memory_space<vmem>>, %arg2: memref<128x64xf32, #tpu.memory_space<vmem>>, %arg3: memref<1x128xf32, #tpu.memory_space<vmem>>, %arg4: memref<1x128xf32, #tpu.memory_space<vmem>>) attributes {dimension_semantics = [#tpu.dimension_semantics<parallel>], iteration_bounds = array<i64: 1>, scalar_prefetch = 0 : i64, scratch_operands = 0 : i64, tpu.core_type = #tpu.core_type<tc>, window_params = [{transform_indices = @transform_0, window_bounds = array<i64: 128, 64>}, {transform_indices = @transform_1, window_bounds = array<i64: 128, 64>}, {transform_indices = @transform_2, window_bounds = array<i64: 1, 128>}, {transform_indices = @transform_3, window_bounds = array<i64: 1, 128>}]} {
    %c0 = arith.constant 0 : index
    %c0_0 = arith.constant 0 : index
    %0 = vector.load %arg1[%c0, %c0_0] : memref<128x64xf32, #tpu.memory_space<vmem>>, vector<128x64xf32>
    %c0_1 = arith.constant 0 : index
    %c0_2 = arith.constant 0 : index
    %1 = vector.load %arg2[%c0_1, %c0_2] : memref<128x64xf32, #tpu.memory_space<vmem>>, vector<128x64xf32>
    %2 = arith.subf %0, %1 : vector<128x64xf32>
    %cst = arith.constant 9.99999997E-7 : f32
    %3 = vector.broadcast %cst : f32 to vector<128x64xf32>
    %4 = arith.addf %2, %3 : vector<128x64xf32>
    %5 = arith.mulf %4, %4 : vector<128x64xf32>
    %cst_3 = arith.constant 1.000000e+00 : f32
    %6 = vector.broadcast %cst_3 : f32 to vector<64x1xf32>
    %cst_4 = arith.constant dense<0.000000e+00> : vector<128x1xf32>
    %7 = tpu.matmul %5, %6, %cst_4 {dimension_numbers = #tpu.dot_dimension_numbers<[1], [0], [0], [1], [0, 0, 1, 1], [], []>, precision = #tpu.contract_precision<fp32>} : vector<128x64xf32>, vector<64x1xf32>, vector<128x1xf32> -> vector<128x1xf32>
    %8 = tpu.transpose %7, [1, 0] : vector<128x1xf32> -> vector<1x128xf32>
    %9 = math.sqrt %8 : vector<1x128xf32>
    %c0_5 = arith.constant 0 : index
    %c0_6 = arith.constant 0 : index
    %10 = vector.load %arg3[%c0_5, %c0_6] : memref<1x128xf32, #tpu.memory_space<vmem>>, vector<1x128xf32>
    %cst_7 = arith.constant 9.99999974E-5 : f32
    %11 = vector.broadcast %cst_7 : f32 to vector<1x128xf32>
    %12 = arith.addf %9, %11 : vector<1x128xf32>
    %cst_8 = arith.constant 1.500000e+01 : f32
    %13 = vector.broadcast %cst_8 : f32 to vector<1x128xf32>
    %14 = arith.subf %13, %12 : vector<1x128xf32>
    %cst_9 = arith.constant 0.000000e+00 : f32
    %15 = vector.broadcast %cst_9 : f32 to vector<1x128xf32>
    %16 = arith.maximumf %14, %15 : vector<1x128xf32>
    %cst_10 = arith.constant 1.000000e+00 : f32
    %17 = vector.broadcast %cst_10 : f32 to vector<1x128xf32>
    %18 = arith.subf %17, %10 : vector<1x128xf32>
    %19 = arith.mulf %18, %9 : vector<1x128xf32>
    %20 = arith.mulf %10, %16 : vector<1x128xf32>
    %21 = arith.addf %19, %20 : vector<1x128xf32>
    %cst_11 = arith.constant 5.000000e-01 : f32
    %22 = vector.broadcast %cst_11 : f32 to vector<1x128xf32>
    %23 = arith.mulf %22, %21 : vector<1x128xf32>
    %c0_12 = arith.constant 0 : index
    %c0_13 = arith.constant 0 : index
    %24 = vector.load %arg4[%c0_12, %c0_13] : memref<1x128xf32, #tpu.memory_space<vmem>>, vector<1x128xf32>
    tpu.vector_store %arg4[%c0_12, %c0_13], %23 {strides = array<i32>} : memref<1x128xf32, #tpu.memory_space<vmem>>, vector<1x128xf32>,
    return
  }
  func.func @transform_0(%arg0: i32) -> (i32, i32) {
    %c0_i32 = arith.constant 0 : i32
    %c0_i32_0 = arith.constant 0 : i32
    return %arg0, %c0_i32 : i32, i32
  }
  func.func @transform_1(%arg0: i32) -> (i32, i32) {
    %c0_i32 = arith.constant 0 : i32
    %c0_i32_0 = arith.constant 0 : i32
    return %arg0, %c0_i32 : i32, i32
  }
  func.func @transform_2(%arg0: i32) -> (i32, i32) {
    %c0_i32 = arith.constant 0 : i32
    %c0_i32_0 = arith.constant 0 : i32
    return %c0_i32, %arg0 : i32, i32
  }
  func.func @transform_3(%arg0: i32) -> (i32, i32) {
    %c0_i32 = arith.constant 0 : i32
    %c0_i32_0 = arith.constant 0 : i32
    return %c0_i32, %arg0 : i32, i32
  }
}

</mosaic_0001>

<llo_original>
// kernel: tpu_custom_call.1
$region0: #{tpu_custom_call.1}
  #allocation0 [shape = 'u32[]', space=smem, size = 0x4, offset = 0x4, fixed_abs, tag = 'smem constant byte address 0x4 - core index']
  #allocation1 [shape = 'u32[144,128]{1,0:T(1,128)}', space=vmem, size = 0x12000, scoped, tag = 'internal scratch']
  %s0 = inlined_call_operand.hbm [shape: f32[37,64], index: 0, kind: input, shape index: {}]
  %s1 = inlined_call_operand.hbm [shape: f32[37,64], index: 1, kind: input, shape index: {}]
  %s2 = inlined_call_operand.vmem [shape: f32[1,37], index: 2, kind: input, shape index: {}]
  %s3 = inlined_call_operand.hbm [shape: f32[1,37], index: 3, kind: output, shape index: {}]
  %s4 = sld [smem:[#allocation0]]
  $region30: #{tpu_custom_call.1} parent=0
    _
  %s6 = ssub.s32 1, %s4
  %s7 = scalar_select 0, %s6, %s4
  $region1: #{tpu_custom_call.1} parent=0
    #allocation2 [shape = 'u8[65536]{0}', space=vmem, size = 0x10000, scoped, tag = 'input window, operand 0, single buffered']
    #allocation3 [shape = 's32[1]{0}', space=sflag, size = 0x4, scoped, tag = 'scoped memory for tpu_custom_call.1']
    #allocation4 [shape = 's32[1]{0}', space=sflag, size = 0x4, scoped, tag = 'scoped memory for tpu_custom_call.1']
    #allocation5 [shape = 'u8[65536]{0}', space=vmem, size = 0x10000, scoped, tag = 'input window, operand 1, single buffered']
    #allocation6 [shape = 's32[1]{0}', space=sflag, size = 0x4, scoped, tag = 'scoped memory for tpu_custom_call.1']
    #allocation7 [shape = 'u8[512]{0}', space=vmem, size = 0x400, scoped, tag = 'output window, operand 0, single buffered']
    %8 = vsyncpa [#allocation3], 0
    %9 = vsyncpa [#allocation6], 0
    %10 = vsyncpa [#allocation4], 0
    // Predicated region
    $region2: #{tpu_custom_call.1} parent=1 // pred_check
      _
    $region3: #{tpu_custom_call.1} parent=1 // pred_check_branch
      %12 = sbr.rel (0) target = $region5
    $region4: #{tpu_custom_call.1} parent=1 // pred_region
      %s14 = ssub.s32 2048, 640
      %15 = vsyncadd [#allocation3], %s14
      %s16 = sshll.u32 [#allocation2], 4
      %s17 = int_to_ptr.vmem [resolvable:$true] %s16
      %22 = dma.hbm_to_vmem [thread:$0]  %s0, 640, %s17, [#allocation3], 128, 128, 8
    $region5: #{tpu_custom_call.1} parent=1 // pred_fallthru
      _
    // Predicated region
    $region6: #{tpu_custom_call.1} parent=1 // pred_check
      _
    $region7: #{tpu_custom_call.1} parent=1 // pred_check_branch
      %24 = sbr.rel (0) target = $region9
    $region8: #{tpu_custom_call.1} parent=1 // pred_region
      %s26 = ssub.s32 2048, 640
      %27 = vsyncadd [#allocation6], %s26
      %s28 = sshll.u32 [#allocation5], 4
      %s29 = int_to_ptr.vmem [resolvable:$true] %s28
      %34 = dma.hbm_to_vmem [thread:$0]  %s1, 640, %s29, [#allocation6], 128, 128, 8
    $region9: #{tpu_custom_call.1} parent=1 // pred_fallthru
      _
    // Predicated region
    $region10: #{tpu_custom_call.1} parent=1 // pred_check
      _
    $region11: #{tpu_custom_call.1} parent=1 // pred_check_branch
      %36 = sbr.rel (0) target = $region13
    $region12: #{tpu_custom_call.1} parent=1 // pred_region
      _
    $region13: #{tpu_custom_call.1} parent=1 // pred_fallthru
      _
    // Predicated region
    $region14: #{tpu_custom_call.1} parent=1 // pred_check
      _
    $region15: #{tpu_custom_call.1} parent=1 // pred_check_branch
      %38 = sbr.rel (0) target = $region17
    $region16: #{tpu_custom_call.1} parent=1 // pred_region
      %39 = dma.done [#allocation3], 2048
    $region17: #{tpu_custom_call.1} parent=1 // pred_fallthru
      _
    // Predicated region
    $region18: #{tpu_custom_call.1} parent=1 // pred_check
      _
    $region19: #{tpu_custom_call.1} parent=1 // pred_check_branch
      %41 = sbr.rel (0) target = $region21
    $region20: #{tpu_custom_call.1} parent=1 // pred_region
      %42 = dma.done [#allocation6], 2048
    $region21: #{tpu_custom_call.1} parent=1 // pred_fallthru
      _
    %v43 = vld [vmem:[#allocation2] sm:$0xff]
    %v44 = vld [vmem:[#allocation2 + $0x8] sm:$0xff]
    %v45 = vld [vmem:[#allocation2 + $0x10] sm:$0xff]
    %v46 = vld [vmem:[#allocation2 + $0x18] sm:$0xff]
    %v47 = vld [vmem:[#allocation2 + $0x20] sm:$0xff]
    %v48 = vld [vmem:[#allocation2 + $0x28] sm:$0xff]
    %v49 = vld [vmem:[#allocation2 + $0x30] sm:$0xff]
    %v50 = vld [vmem:[#allocation2 + $0x38] sm:$0xff]
    %v51 = vld [vmem:[#allocation2 + $0x40] sm:$0xff]
    %v52 = vld [vmem:[#allocation2 + $0x48] sm:$0xff]
    %v53 = vld [vmem:[#allocation2 + $0x50] sm:$0xff]
    %v54 = vld [vmem:[#allocation2 + $0x58] sm:$0xff]
    %v55 = vld [vmem:[#allocation2 + $0x60] sm:$0xff]
    %v56 = vld [vmem:[#allocation2 + $0x68] sm:$0xff]
    %v57 = vld [vmem:[#allocation2 + $0x70] sm:$0xff]
    %v58 = vld [vmem:[#allocation2 + $0x78] sm:$0xff]
    %v59 = vld [vmem:[#allocation5] sm:$0xff]
    %v60 = vld [vmem:[#allocation5 + $0x8] sm:$0xff]
    %v61 = vld [vmem:[#allocation5 + $0x10] sm:$0xff]
    %v62 = vld [vmem:[#allocation5 + $0x18] sm:$0xff]
    %v63 = vld [vmem:[#allocation5 + $0x20] sm:$0xff]
    %v64 = vld [vmem:[#allocation5 + $0x28] sm:$0xff]
    %v65 = vld [vmem:[#allocation5 + $0x30] sm:$0xff]
    %v66 = vld [vmem:[#allocation5 + $0x38] sm:$0xff]
    %v67 = vld [vmem:[#allocation5 + $0x40] sm:$0xff]
    %v68 = vld [vmem:[#allocation5 + $0x48] sm:$0xff]
    %v69 = vld [vmem:[#allocation5 + $0x50] sm:$0xff]
    %v70 = vld [vmem:[#allocation5 + $0x58] sm:$0xff]
    %v71 = vld [vmem:[#allocation5 + $0x60] sm:$0xff]
    %v72 = vld [vmem:[#allocation5 + $0x68] sm:$0xff]
    %v73 = vld [vmem:[#allocation5 + $0x70] sm:$0xff]
    %v74 = vld [vmem:[#allocation5 + $0x78] sm:$0xff]
    %v75 = vsub.f32 %v43, %v59
    %v76 = vsub.f32 %v44, %v60
    %v77 = vsub.f32 %v45, %v61
    %v78 = vsub.f32 %v46, %v62
    %v79 = vsub.f32 %v47, %v63
    %v80 = vsub.f32 %v48, %v64
    %v81 = vsub.f32 %v49, %v65
    %v82 = vsub.f32 %v50, %v66
    %v83 = vsub.f32 %v51, %v67
    %v84 = vsub.f32 %v52, %v68
    %v85 = vsub.f32 %v53, %v69
    %v86 = vsub.f32 %v54, %v70
    %v87 = vsub.f32 %v55, %v71
    %v88 = vsub.f32 %v56, %v72
    %v89 = vsub.f32 %v57, %v73
    %v90 = vsub.f32 %v58, %v74
    %v91 = vadd.f32 %v75, 1e-06
    %v92 = vadd.f32 %v76, 1e-06
    %v93 = vadd.f32 %v77, 1e-06
    %v94 = vadd.f32 %v78, 1e-06
    %v95 = vadd.f32 %v79, 1e-06
    %v96 = vadd.f32 %v80, 1e-06
    %v97 = vadd.f32 %v81, 1e-06
    %v98 = vadd.f32 %v82, 1e-06
    %v99 = vadd.f32 %v83, 1e-06
    %v100 = vadd.f32 %v84, 1e-06
    %v101 = vadd.f32 %v85, 1e-06
    %v102 = vadd.f32 %v86, 1e-06
    %v103 = vadd.f32 %v87, 1e-06
    %v104 = vadd.f32 %v88, 1e-06
    %v105 = vadd.f32 %v89, 1e-06
    %v106 = vadd.f32 %v90, 1e-06
    %v107 = vmul.f32 %v91, %v91
    %v108 = vmul.f32 %v92, %v92
    %v109 = vmul.f32 %v93, %v93
    %v110 = vmul.f32 %v94, %v94
    %v111 = vmul.f32 %v95, %v95
    %v112 = vmul.f32 %v96, %v96
    %v113 = vmul.f32 %v97, %v97
    %v114 = vmul.f32 %v98, %v98
    %v115 = vmul.f32 %v99, %v99
    %v116 = vmul.f32 %v100, %v100
    %v117 = vmul.f32 %v101, %v101
    %v118 = vmul.f32 %v102, %v102
    %v119 = vmul.f32 %v103, %v103
    %v120 = vmul.f32 %v104, %v104
    %v121 = vmul.f32 %v105, %v105
    %v122 = vmul.f32 %v106, %v106
    %vm123 = vcmask 523264
    %v125 = vsel %vm123, %v107, 0
    %v128 = vsel %vm123, %v108, 0
    %v131 = vsel %vm123, %v109, 0
    %v134 = vsel %vm123, %v110, 0
    %v137 = vsel %vm123, %v111, 0
    %v140 = vsel %vm123, %v112, 0
    %v143 = vsel %vm123, %v113, 0
    %v146 = vsel %vm123, %v114, 0
    %v149 = vsel %vm123, %v115, 0
    %v152 = vsel %vm123, %v116, 0
    %v155 = vsel %vm123, %v117, 0
    %v158 = vsel %vm123, %v118, 0
    %v161 = vsel %vm123, %v119, 0
    %v164 = vsel %vm123, %v120, 0
    %v167 = vsel %vm123, %v121, 0
    %v170 = vsel %vm123, %v122, 0
    %172 = vmatprep.subr.mxu0 0.0
    %173 = vmatpush1.msra.mxu0 1.0
    %174 = vmatprep.subr.mxu0 0.0
    %175 = vmatpush1.msra.mxu0 1.0
    %176 = vmatprep.subr.mxu0 0.0
    %177 = vmatpush1.msra.mxu0 1.0
    %178 = vmatprep.subr.mxu0 0.0
    %179 = vmatpush1.msra.mxu0 1.0
    %180 = vmatprep.subr.mxu0 0.0
    %181 = vmatpush1.msra.mxu0 1.0
    %182 = vmatprep.subr.mxu0 0.0
    %183 = vmatpush1.msra.mxu0 1.0
    %184 = vmatprep.subr.mxu0 0.0
    %185 = vmatpush1.msra.mxu0 1.0
    %186 = vmatprep.subr.mxu0 0.0
    %187 = vmatpush1.msra.mxu0 1.0
    %188 = vmatprep.subr.mxu0 0.0
    %189 = vmatpush1.msra.mxu0 0.0
    %190 = vmatprep.subr.mxu0 0.0
    %191 = vmatpush1.msra.mxu0 0.0
    %192 = vmatprep.subr.mxu0 0.0
    %193 = vmatpush1.msra.mxu0 0.0
    %194 = vmatprep.subr.mxu0 0.0
    %195 = vmatpush1.msra.mxu0 0.0
    %196 = vmatprep.subr.mxu0 0.0
    %197 = vmatpush1.msra.mxu0 0.0
    %198 = vmatprep.subr.mxu0 0.0
    %199 = vmatpush1.msra.mxu0 0.0
    %200 = vmatprep.subr.mxu0 0.0
    %201 = vmatpush1.msra.mxu0 0.0
    %202 = vmatprep.subr.mxu0 0.0
    %203 = vmatpush1.msra.mxu0 0.0
    %204 = vmatprep.subr.mxu0 0.0
    %205 = vmatpush1.msra.mxu0 0.0
    %206 = vmatprep.subr.mxu0 0.0
    %207 = vmatpush1.msra.mxu0 0.0
    %208 = vmatprep.subr.mxu0 0.0
    %209 = vmatpush1.msra.mxu0 0.0
    %210 = vmatprep.subr.mxu0 0.0
    %211 = vmatpush1.msra.mxu0 0.0
    %212 = vmatprep.subr.mxu0 0.0
    %213 = vmatpush1.msra.mxu0 0.0
    %214 = vmatprep.subr.mxu0 0.0
    %215 = vmatpush1.msra.mxu0 0.0
    %216 = vmatprep.subr.mxu0 0.0
    %217 = vmatpush1.msra.mxu0 0.0
    %218 = vmatprep.subr.mxu0 0.0
    %219 = vmatpush1.msra.mxu0 0.0
    %220 = vmatprep.subr.mxu0 0.0
    %221 = vmatpush1.msra.mxu0 0.0
    %222 = vmatprep.subr.mxu0 0.0
    %223 = vmatpush1.msra.mxu0 0.0
    %224 = vmatprep.subr.mxu0 0.0
    %225 = vmatpush1.msra.mxu0 0.0
    %226 = vmatprep.subr.mxu0 0.0
    %227 = vmatpush1.msra.mxu0 0.0
    %228 = vmatprep.subr.mxu0 0.0
    %229 = vmatpush1.msra.mxu0 0.0
    %230 = vmatprep.subr.mxu0 0.0
    %231 = vmatpush1.msra.mxu0 0.0
    %232 = vmatprep.subr.mxu0 0.0
    %233 = vmatpush1.msra.mxu0 0.0
    %234 = vmatprep.subr.mxu0 0.0
    %235 = vmatpush1.msra.mxu0 0.0
    %236 = vmatprep.mubr.f32.mxu0 0.0
    %v237 = vand.u32 %v125, 4294901760
    %v238 = vsub.f32 %v125, %v237
    %v239 = vand.u32 %v238, 4294901760
    %v240 = vsub.f32 %v238, %v239
    %v241 = vand.u32 %v240, 4294901760
    %242 = vmatmul.mubr.f32.gmra.mrb[0].mxu0 %v241
    %v243 = vpop.f32.mrb[0].mxu0
    %v244 = vadd.f32 0.0, %v243
    %v245 = vpop.f32.mrb[0].mxu0
    %246 = vmatprep.mubr.f32.mxu0 0.0
    %v247 = vand.u32 %v128, 4294901760
    %v248 = vsub.f32 %v128, %v247
    %v249 = vand.u32 %v248, 4294901760
    %v250 = vsub.f32 %v248, %v249
    %v251 = vand.u32 %v250, 4294901760
    %252 = vmatmul.mubr.f32.gmra.mrb[0].mxu0 %v251
    %v253 = vpop.f32.mrb[0].mxu0
    %v254 = vadd.f32 0.0, %v253
    %v255 = vpop.f32.mrb[0].mxu0
    %256 = vmatprep.mubr.f32.mxu0 0.0
    %v257 = vand.u32 %v131, 4294901760
    %v258 = vsub.f32 %v131, %v257
    %v259 = vand.u32 %v258, 4294901760
    %v260 = vsub.f32 %v258, %v259
    %v261 = vand.u32 %v260, 4294901760
    %262 = vmatmul.mubr.f32.gmra.mrb[0].mxu0 %v261
    %v263 = vpop.f32.mrb[0].mxu0
    %v264 = vadd.f32 0.0, %v263
    %v265 = vpop.f32.mrb[0].mxu0
    %266 = vmatprep.mubr.f32.mxu0 0.0
    %v267 = vand.u32 %v134, 4294901760
    %v268 = vsub.f32 %v134, %v267
    %v269 = vand.u32 %v268, 4294901760
    %v270 = vsub.f32 %v268, %v269
    %v271 = vand.u32 %v270, 4294901760
    %272 = vmatmul.mubr.f32.gmra.mrb[0].mxu0 %v271
    %v273 = vpop.f32.mrb[0].mxu0
    %v274 = vadd.f32 0.0, %v273
    %v275 = vpop.f32.mrb[0].mxu0
    %276 = vmatprep.mubr.f32.mxu0 0.0
    %v277 = vand.u32 %v137, 4294901760
    %v278 = vsub.f32 %v137, %v277
    %v279 = vand.u32 %v278, 4294901760
    %v280 = vsub.f32 %v278, %v279
    %v281 = vand.u32 %v280, 4294901760
    %282 = vmatmul.mubr.f32.gmra.mrb[0].mxu0 %v281
    %v283 = vpop.f32.mrb[0].mxu0
    %v284 = vadd.f32 0.0, %v283
    %v285 = vpop.f32.mrb[0].mxu0
    %286 = vmatprep.mubr.f32.mxu0 0.0
    %v287 = vand.u32 %v140, 4294901760
    %v288 = vsub.f32 %v140, %v287
    %v289 = vand.u32 %v288, 4294901760
    %v290 = vsub.f32 %v288, %v289
    %v291 = vand.u32 %v290, 4294901760
    %292 = vmatmul.mubr.f32.gmra.mrb[0].mxu0 %v291
    %v293 = vpop.f32.mrb[0].mxu0
    %v294 = vadd.f32 0.0, %v293
    %v295 = vpop.f32.mrb[0].mxu0
    %296 = vmatprep.mubr.f32.mxu0 0.0
    %v297 = vand.u32 %v143, 4294901760
    %v298 = vsub.f32 %v143, %v297
    %v299 = vand.u32 %v298, 4294901760
    %v300 = vsub.f32 %v298, %v299
    %v301 = vand.u32 %v300, 4294901760
    %302 = vmatmul.mubr.f32.gmra.mrb[0].mxu0 %v301
    %v303 = vpop.f32.mrb[0].mxu0
    %v304 = vadd.f32 0.0, %v303
    %v305 = vpop.f32.mrb[0].mxu0
    %306 = vmatprep.mubr.f32.mxu0 0.0
    %v307 = vand.u32 %v146, 4294901760
    %v308 = vsub.f32 %v146, %v307
    %v309 = vand.u32 %v308, 4294901760
    %v310 = vsub.f32 %v308, %v309
    %v311 = vand.u32 %v310, 4294901760
    %312 = vmatmul.mubr.f32.gmra.mrb[0].mxu0 %v311
    %v313 = vpop.f32.mrb[0].mxu0
    %v314 = vadd.f32 0.0, %v313
    %v315 = vpop.f32.mrb[0].mxu0
    %316 = vmatprep.mubr.f32.mxu0 0.0
    %v317 = vand.u32 %v149, 4294901760
    %v318 = vsub.f32 %v149, %v317
    %v319 = vand.u32 %v318, 4294901760
    %v320 = vsub.f32 %v318, %v319
    %v321 = vand.u32 %v320, 4294901760
    %322 = vmatmul.mubr.f32.gmra.mrb[0].mxu0 %v321
    %v323 = vpop.f32.mrb[0].mxu0
    %v324 = vadd.f32 0.0, %v323
    %v325 = vpop.f32.mrb[0].mxu0
    %326 = vmatprep.mubr.f32.mxu0 0.0
    %v327 = vand.u32 %v152, 4294901760
    %v328 = vsub.f32 %v152, %v327
    %v329 = vand.u32 %v328, 4294901760
    %v330 = vsub.f32 %v328, %v329
    %v331 = vand.u32 %v330, 4294901760
    %332 = vmatmul.mubr.f32.gmra.mrb[0].mxu0 %v331
    %v333 = vpop.f32.mrb[0].mxu0
    %v334 = vadd.f32 0.0, %v333
    %v335 = vpop.f32.mrb[0].mxu0
    %336 = vmatprep.mubr.f32.mxu0 0.0
    %v337 = vand.u32 %v155, 4294901760
    %v338 = vsub.f32 %v155, %v337
    %v339 = vand.u32 %v338, 4294901760
    %v340 = vsub.f32 %v338, %v339
    %v341 = vand.u32 %v340, 4294901760
    %342 = vmatmul.mubr.f32.gmra.mrb[0].mxu0 %v341
    %v343 = vpop.f32.mrb[0].mxu0
    %v344 = vadd.f32 0.0, %v343
    %v345 = vpop.f32.mrb[0].mxu0
    %346 = vmatprep.mubr.f32.mxu0 0.0
    %v347 = vand.u32 %v158, 4294901760
    %v348 = vsub.f32 %v158, %v347
    %v349 = vand.u32 %v348, 4294901760
    %v350 = vsub.f32 %v348, %v349
    %v351 = vand.u32 %v350, 4294901760
    %352 = vmatmul.mubr.f32.gmra.mrb[0].mxu0 %v351
    %v353 = vpop.f32.mrb[0].mxu0
    %v354 = vadd.f32 0.0, %v353
    %v355 = vpop.f32.mrb[0].mxu0
    %356 = vmatprep.mubr.f32.mxu0 0.0
    %v357 = vand.u32 %v161, 4294901760
    %v358 = vsub.f32 %v161, %v357
    %v359 = vand.u32 %v358, 4294901760
    %v360 = vsub.f32 %v358, %v359
    %v361 = vand.u32 %v360, 4294901760
    %362 = vmatmul.mubr.f32.gmra.mrb[0].mxu0 %v361
    %v363 = vpop.f32.mrb[0].mxu0
    %v364 = vadd.f32 0.0, %v363
    %v365 = vpop.f32.mrb[0].mxu0
    %366 = vmatprep.mubr.f32.mxu0 0.0
    %v367 = vand.u32 %v164, 4294901760
    %v368 = vsub.f32 %v164, %v367
    %v369 = vand.u32 %v368, 4294901760
    %v370 = vsub.f32 %v368, %v369
    %v371 = vand.u32 %v370, 4294901760
    %372 = vmatmul.mubr.f32.gmra.mrb[0].mxu0 %v371
    %v373 = vpop.f32.mrb[0].mxu0
    %v374 = vadd.f32 0.0, %v373
    %v375 = vpop.f32.mrb[0].mxu0
    %376 = vmatprep.mubr.f32.mxu0 0.0
    %v377 = vand.u32 %v167, 4294901760
    %v378 = vsub.f32 %v167, %v377
    %v379 = vand.u32 %v378, 4294901760
    %v380 = vsub.f32 %v378, %v379
    %v381 = vand.u32 %v380, 4294901760
    %382 = vmatmul.mubr.f32.gmra.mrb[0].mxu0 %v381
    %v383 = vpop.f32.mrb[0].mxu0
    %v384 = vadd.f32 0.0, %v383
    %v385 = vpop.f32.mrb[0].mxu0
    %386 = vmatprep.mubr.f32.mxu0 0.0
    %v387 = vand.u32 %v170, 4294901760
    %v388 = vsub.f32 %v170, %v387
    %v389 = vand.u32 %v388, 4294901760
    %v390 = vsub.f32 %v388, %v389
    %v391 = vand.u32 %v390, 4294901760
    %392 = vmatmul.mubr.f32.gmra.mrb[0].mxu0 %v391
    %v393 = vpop.f32.mrb[0].mxu0
    %v394 = vadd.f32 0.0, %v393
    %v395 = vpop.f32.mrb[0].mxu0
    %396 = vdwg.mxu0
    %397 = vmatprep.subr.mxu0 0.0
    %398 = vmatpush1.msra.mxu0 0.0
    %399 = vmatprep.subr.mxu0 0.0
    %400 = vmatpush1.msra.mxu0 0.0
    %401 = vmatprep.subr.mxu0 0.0
    %402 = vmatpush1.msra.mxu0 0.0
    %403 = vmatprep.subr.mxu0 0.0
    %404 = vmatpush1.msra.mxu0 0.0
    %405 = vmatprep.subr.mxu0 0.0
    %406 = vmatpush1.msra.mxu0 0.0
    %407 = vmatprep.subr.mxu0 0.0
    %408 = vmatpush1.msra.mxu0 0.0
    %409 = vmatprep.subr.mxu0 0.0
    %410 = vmatpush1.msra.mxu0 0.0
    %411 = vmatprep.subr.mxu0 0.0
    %412 = vmatpush1.msra.mxu0 0.0
    %413 = vmatprep.subr.mxu0 0.0
    %414 = vmatpush1.msra.mxu0 0.0
    %415 = vmatprep.subr.mxu0 0.0
    %416 = vmatpush1.msra.mxu0 0.0
    %417 = vmatprep.subr.mxu0 0.0
    %418 = vmatpush1.msra.mxu0 0.0
    %419 = vmatprep.subr.mxu0 0.0
    %420 = vmatpush1.msra.mxu0 0.0
    %421 = vmatprep.subr.mxu0 0.0
    %422 = vmatpush1.msra.mxu0 0.0
    %423 = vmatprep.subr.mxu0 0.0
    %424 = vmatpush1.msra.mxu0 0.0
    %425 = vmatprep.subr.mxu0 0.0
    %426 = vmatpush1.msra.mxu0 0.0
    %427 = vmatprep.subr.mxu0 0.0
    %428 = vmatpush1.msra.mxu0 0.0
    %429 = vmatprep.subr.mxu0 0.0
    %430 = vmatpush1.msra.mxu0 0.0
    %431 = vmatprep.subr.mxu0 0.0
    %432 = vmatpush1.msra.mxu0 0.0
    %433 = vmatprep.subr.mxu0 0.0
    %434 = vmatpush1.msra.mxu0 0.0
    %435 = vmatprep.subr.mxu0 0.0
    %436 = vmatpush1.msra.mxu0 0.0
    %437 = vmatprep.subr.mxu0 0.0
    %438 = vmatpush1.msra.mxu0 0.0
    %439 = vmatprep.subr.mxu0 0.0
    %440 = vmatpush1.msra.mxu0 0.0
    %441 = vmatprep.subr.mxu0 0.0
    %442 = vmatpush1.msra.mxu0 0.0
    %443 = vmatprep.subr.mxu0 0.0
    %444 = vmatpush1.msra.mxu0 0.0
    %445 = vmatprep.subr.mxu0 0.0
    %446 = vmatpush1.msra.mxu0 0.0
    %447 = vmatprep.subr.mxu0 0.0
    %448 = vmatpush1.msra.mxu0 0.0
    %449 = vmatprep.subr.mxu0 0.0
    %450 = vmatpush1.msra.mxu0 0.0
    %451 = vmatprep.subr.mxu0 0.0
    %452 = vmatpush1.msra.mxu0 0.0
    %453 = vmatprep.subr.mxu0 0.0
    %454 = vmatpush1.msra.mxu0 0.0
    %455 = vmatprep.subr.mxu0 0.0
    %456 = vmatpush1.msra.mxu0 0.0
    %457 = vmatprep.subr.mxu0 0.0
    %458 = vmatpush1.msra.mxu0 0.0
    %459 = vmatprep.subr.mxu0 0.0
    %460 = vmatpush1.msra.mxu0 0.0
    %461 = vmatprep.mubr.f32.mxu0 0.0
    %v462 = vand.u32 %v125, 4294901760
    %463 = vmatmul.mubr.f32.gmra.mrb[0].mxu0 %v462
    %v464 = vpop.f32.mrb[0].mxu0
    %v465 = vadd.f32 %v244, %v464
    %v466 = vpop.f32.mrb[0].mxu0
    %467 = vmatprep.mubr.f32.mxu0 0.0
    %v468 = vand.u32 %v128, 4294901760
    %469 = vmatmul.mubr.f32.gmra.mrb[0].mxu0 %v468
    %v470 = vpop.f32.mrb[0].mxu0
    %v471 = vadd.f32 %v254, %v470
    %v472 = vpop.f32.mrb[0].mxu0
    %473 = vmatprep.mubr.f32.mxu0 0.0
    %v474 = vand.u32 %v131, 4294901760
    %475 = vmatmul.mubr.f32.gmra.mrb[0].mxu0 %v474
    %v476 = vpop.f32.mrb[0].mxu0
    %v477 = vadd.f32 %v264, %v476
    %v478 = vpop.f32.mrb[0].mxu0
    %479 = vmatprep.mubr.f32.mxu0 0.0
    %v480 = vand.u32 %v134, 4294901760
    %481 = vmatmul.mubr.f32.gmra.mrb[0].mxu0 %v480
    %v482 = vpop.f32.mrb[0].mxu0
    %v483 = vadd.f32 %v274, %v482
    %v484 = vpop.f32.mrb[0].mxu0
    %485 = vmatprep.mubr.f32.mxu0 0.0
    %v486 = vand.u32 %v137, 4294901760
    %487 = vmatmul.mubr.f32.gmra.mrb[0].mxu0 %v486
    %v488 = vpop.f32.mrb[0].mxu0
    %v489 = vadd.f32 %v284, %v488
    %v490 = vpop.f32.mrb[0].mxu0
    %491 = vmatprep.mubr.f32.mxu0 0.0
    %v492 = vand.u32 %v140, 4294901760
    %493 = vmatmul.mubr.f32.gmra.mrb[0].mxu0 %v492
    %v494 = vpop.f32.mrb[0].mxu0
    %v495 = vadd.f32 %v294, %v494
    %v496 = vpop.f32.mrb[0].mxu0
    %497 = vmatprep.mubr.f32.mxu0 0.0
    %v498 = vand.u32 %v143, 4294901760
    %499 = vmatmul.mubr.f32.gmra.mrb[0].mxu0 %v498
    %v500 = vpop.f32.mrb[0].mxu0
    %v501 = vadd.f32 %v304, %v500
    %v502 = vpop.f32.mrb[0].mxu0
    %503 = vmatprep.mubr.f32.mxu0 0.0
    %v504 = vand.u32 %v146, 4294901760
    %505 = vmatmul.mubr.f32.gmra.mrb[0].mxu0 %v504
    %v506 = vpop.f32.mrb[0].mxu0
    %v507 = vadd.f32 %v314, %v506
    %v508 = vpop.f32.mrb[0].mxu0
    %509 = vmatprep.mubr.f32.mxu0 0.0
    %v510 = vand.u32 %v149, 4294901760
    %511 = vmatmul.mubr.f32.gmra.mrb[0].mxu0 %v510
    %v512 = vpop.f32.mrb[0].mxu0
    %v513 = vadd.f32 %v324, %v512
    %v514 = vpop.f32.mrb[0].mxu0
    %515 = vmatprep.mubr.f32.mxu0 0.0
    %v516 = vand.u32 %v152, 4294901760
    %517 = vmatmul.mubr.f32.gmra.mrb[0].mxu0 %v516
    %v518 = vpop.f32.mrb[0].mxu0
    %v519 = vadd.f32 %v334, %v518
    %v520 = vpop.f32.mrb[0].mxu0
    %521 = vmatprep.mubr.f32.mxu0 0.0
    %v522 = vand.u32 %v155, 4294901760
    %523 = vmatmul.mubr.f32.gmra.mrb[0].mxu0 %v522
    %v524 = vpop.f32.mrb[0].mxu0
    %v525 = vadd.f32 %v344, %v524
    %v526 = vpop.f32.mrb[0].mxu0
    %527 = vmatprep.mubr.f32.mxu0 0.0
    %v528 = vand.u32 %v158, 4294901760
    %529 = vmatmul.mubr.f32.gmra.mrb[0].mxu0 %v528
    %v530 = vpop.f32.mrb[0].mxu0
    %v531 = vadd.f32 %v354, %v530
    %v532 = vpop.f32.mrb[0].mxu0
    %533 = vmatprep.mubr.f32.mxu0 0.0
    %v534 = vand.u32 %v161, 4294901760
    %535 = vmatmul.mubr.f32.gmra.mrb[0].mxu0 %v534
    %v536 = vpop.f32.mrb[0].mxu0
    %v537 = vadd.f32 %v364, %v536
    %v538 = vpop.f32.mrb[0].mxu0
    %539 = vmatprep.mubr.f32.mxu0 0.0
    %v540 = vand.u32 %v164, 4294901760
    %541 = vmatmul.mubr.f32.gmra.mrb[0].mxu0 %v540
    %v542 = vpop.f32.mrb[0].mxu0
    %v543 = vadd.f32 %v374, %v542
    %v544 = vpop.f32.mrb[0].mxu0
    %545 = vmatprep.mubr.f32.mxu0 0.0
    %v546 = vand.u32 %v167, 4294901760
    %547 = vmatmul.mubr.f32.gmra.mrb[0].mxu0 %v546
    %v548 = vpop.f32.mrb[0].mxu0
    %v549 = vadd.f32 %v384, %v548
    %v550 = vpop.f32.mrb[0].mxu0
    %551 = vmatprep.mubr.f32.mxu0 0.0
    %v552 = vand.u32 %v170, 4294901760
    %553 = vmatmul.mubr.f32.gmra.mrb[0].mxu0 %v552
    %v554 = vpop.f32.mrb[0].mxu0
    %v555 = vadd.f32 %v394, %v554
    %v556 = vpop.f32.mrb[0].mxu0
    %557 = vdwg.mxu0
    %558 = vmatprep.subr.mxu0 0.0
    %559 = vmatpush1.msra.mxu0 0.0
    %560 = vmatprep.subr.mxu0 0.0
    %561 = vmatpush1.msra.mxu0 0.0
    %562 = vmatprep.subr.mxu0 0.0
    %563 = vmatpush1.msra.mxu0 0.0
    %564 = vmatprep.subr.mxu0 0.0
    %565 = vmatpush1.msra.mxu0 0.0
    %566 = vmatprep.subr.mxu0 0.0
    %567 = vmatpush1.msra.mxu0 0.0
    %568 = vmatprep.subr.mxu0 0.0
    %569 = vmatpush1.msra.mxu0 0.0
    %570 = vmatprep.subr.mxu0 0.0
    %571 = vmatpush1.msra.mxu0 0.0
    %572 = vmatprep.subr.mxu0 0.0
    %573 = vmatpush1.msra.mxu0 0.0
    %574 = vmatprep.subr.mxu0 0.0
    %575 = vmatpush1.msra.mxu0 0.0
    %576 = vmatprep.subr.mxu0 0.0
    %577 = vmatpush1.msra.mxu0 0.0
    %578 = vmatprep.subr.mxu0 0.0
    %579 = vmatpush1.msra.mxu0 0.0
    %580 = vmatprep.subr.mxu0 0.0
    %581 = vmatpush1.msra.mxu0 0.0
    %582 = vmatprep.subr.mxu0 0.0
    %583 = vmatpush1.msra.mxu0 0.0
    %584 = vmatprep.subr.mxu0 0.0
    %585 = vmatpush1.msra.mxu0 0.0
    %586 = vmatprep.subr.mxu0 0.0
    %587 = vmatpush1.msra.mxu0 0.0
    %588 = vmatprep.subr.mxu0 0.0
    %589 = vmatpush1.msra.mxu0 0.0
    %590 = vmatprep.subr.mxu0 0.0
    %591 = vmatpush1.msra.mxu0 0.0
    %592 = vmatprep.subr.mxu0 0.0
    %593 = vmatpush1.msra.mxu0 0.0
    %594 = vmatprep.subr.mxu0 0.0
    %595 = vmatpush1.msra.mxu0 0.0
    %596 = vmatprep.subr.mxu0 0.0
    %597 = vmatpush1.msra.mxu0 0.0
    %598 = vmatprep.subr.mxu0 0.0
    %599 = vmatpush1.msra.mxu0 0.0
    %600 = vmatprep.subr.mxu0 0.0
    %601 = vmatpush1.msra.mxu0 0.0
    %602 = vmatprep.subr.mxu0 0.0
    %603 = vmatpush1.msra.mxu0 0.0
    %604 = vmatprep.subr.mxu0 0.0
    %605 = vmatpush1.msra.mxu0 0.0
    %606 = vmatprep.subr.mxu0 0.0
    %607 = vmatpush1.msra.mxu0 0.0
    %608 = vmatprep.subr.mxu0 0.0
    %609 = vmatpush1.msra.mxu0 0.0
    %610 = vmatprep.subr.mxu0 0.0
    %611 = vmatpush1.msra.mxu0 0.0
    %612 = vmatprep.subr.mxu0 0.0
    %613 = vmatpush1.msra.mxu0 0.0
    %614 = vmatprep.subr.mxu0 0.0
    %615 = vmatpush1.msra.mxu0 0.0
    %616 = vmatprep.subr.mxu0 0.0
    %617 = vmatpush1.msra.mxu0 0.0
    %618 = vmatprep.subr.mxu0 0.0
    %619 = vmatpush1.msra.mxu0 0.0
    %620 = vmatprep.subr.mxu0 0.0
    %621 = vmatpush1.msra.mxu0 0.0
    %622 = vmatprep.mubr.f32.mxu0 0.0
    %v623 = vand.u32 %v125, 4294901760
    %v624 = vsub.f32 %v125, %v623
    %625 = vmatmul.mubr.f32.gmra.mrb[0].mxu0 %v624
    %v626 = vpop.f32.mrb[0].mxu0
    %v627 = vadd.f32 %v465, %v626
    %v628 = vpop.f32.mrb[0].mxu0
    %629 = vmatprep.mubr.f32.mxu0 0.0
    %v630 = vand.u32 %v128, 4294901760
    %v631 = vsub.f32 %v128, %v630
    %632 = vmatmul.mubr.f32.gmra.mrb[0].mxu0 %v631
    %v633 = vpop.f32.mrb[0].mxu0
    %v634 = vadd.f32 %v471, %v633
    %v635 = vpop.f32.mrb[0].mxu0
    %636 = vmatprep.mubr.f32.mxu0 0.0
    %v637 = vand.u32 %v131, 4294901760
    %v638 = vsub.f32 %v131, %v637
    %639 = vmatmul.mubr.f32.gmra.mrb[0].mxu0 %v638
    %v640 = vpop.f32.mrb[0].mxu0
    %v641 = vadd.f32 %v477, %v640
    %v642 = vpop.f32.mrb[0].mxu0
    %643 = vmatprep.mubr.f32.mxu0 0.0
    %v644 = vand.u32 %v134, 4294901760
    %v645 = vsub.f32 %v134, %v644
    %646 = vmatmul.mubr.f32.gmra.mrb[0].mxu0 %v645
    %v647 = vpop.f32.mrb[0].mxu0
    %v648 = vadd.f32 %v483, %v647
    %v649 = vpop.f32.mrb[0].mxu0
    %650 = vmatprep.mubr.f32.mxu0 0.0
    %v651 = vand.u32 %v137, 4294901760
    %v652 = vsub.f32 %v137, %v651
    %653 = vmatmul.mubr.f32.gmra.mrb[0].mxu0 %v652
    %v654 = vpop.f32.mrb[0].mxu0
    %v655 = vadd.f32 %v489, %v654
    %v656 = vpop.f32.mrb[0].mxu0
    %657 = vmatprep.mubr.f32.mxu0 0.0
    %v658 = vand.u32 %v140, 4294901760
    %v659 = vsub.f32 %v140, %v658
    %660 = vmatmul.mubr.f32.gmra.mrb[0].mxu0 %v659
    %v661 = vpop.f32.mrb[0].mxu0
    %v662 = vadd.f32 %v495, %v661
    %v663 = vpop.f32.mrb[0].mxu0
    %664 = vmatprep.mubr.f32.mxu0 0.0
    %v665 = vand.u32 %v143, 4294901760
    %v666 = vsub.f32 %v143, %v665
    %667 = vmatmul.mubr.f32.gmra.mrb[0].mxu0 %v666
    %v668 = vpop.f32.mrb[0].mxu0
    %v669 = vadd.f32 %v501, %v668
    %v670 = vpop.f32.mrb[0].mxu0
    %671 = vmatprep.mubr.f32.mxu0 0.0
    %v672 = vand.u32 %v146, 4294901760
    %v673 = vsub.f32 %v146, %v672
    %674 = vmatmul.mubr.f32.gmra.mrb[0].mxu0 %v673
    %v675 = vpop.f32.mrb[0].mxu0
    %v676 = vadd.f32 %v507, %v675
    %v677 = vpop.f32.mrb[0].mxu0
    %678 = vmatprep.mubr.f32.mxu0 0.0
    %v679 = vand.u32 %v149, 4294901760
    %v680 = vsub.f32 %v149, %v679
    %681 = vmatmul.mubr.f32.gmra.mrb[0].mxu0 %v680
    %v682 = vpop.f32.mrb[0].mxu0
    %v683 = vadd.f32 %v513, %v682
    %v684 = vpop.f32.mrb[0].mxu0
    %685 = vmatprep.mubr.f32.mxu0 0.0
    %v686 = vand.u32 %v152, 4294901760
    %v687 = vsub.f32 %v152, %v686
    %688 = vmatmul.mubr.f32.gmra.mrb[0].mxu0 %v687
    %v689 = vpop.f32.mrb[0].mxu0
    %v690 = vadd.f32 %v519, %v689
    %v691 = vpop.f32.mrb[0].mxu0
    %692 = vmatprep.mubr.f32.mxu0 0.0
    %v693 = vand.u32 %v155, 4294901760
    %v694 = vsub.f32 %v155, %v693
    %695 = vmatmul.mubr.f32.gmra.mrb[0].mxu0 %v694
    %v696 = vpop.f32.mrb[0].mxu0
    %v697 = vadd.f32 %v525, %v696
    %v698 = vpop.f32.mrb[0].mxu0
    %699 = vmatprep.mubr.f32.mxu0 0.0
    %v700 = vand.u32 %v158, 4294901760
    %v701 = vsub.f32 %v158, %v700
    %702 = vmatmul.mubr.f32.gmra.mrb[0].mxu0 %v701
    %v703 = vpop.f32.mrb[0].mxu0
    %v704 = vadd.f32 %v531, %v703
    %v705 = vpop.f32.mrb[0].mxu0
    %706 = vmatprep.mubr.f32.mxu0 0.0
    %v707 = vand.u32 %v161, 4294901760
    %v708 = vsub.f32 %v161, %v707
    %709 = vmatmul.mubr.f32.gmra.mrb[0].mxu0 %v708
    %v710 = vpop.f32.mrb[0].mxu0
    %v711 = vadd.f32 %v537, %v710
    %v712 = vpop.f32.mrb[0].mxu0
    %713 = vmatprep.mubr.f32.mxu0 0.0
    %v714 = vand.u32 %v164, 4294901760
    %v715 = vsub.f32 %v164, %v714
    %716 = vmatmul.mubr.f32.gmra.mrb[0].mxu0 %v715
    %v717 = vpop.f32.mrb[0].mxu0
    %v718 = vadd.f32 %v543, %v717
    %v719 = vpop.f32.mrb[0].mxu0
    %720 = vmatprep.mubr.f32.mxu0 0.0
    %v721 = vand.u32 %v167, 4294901760
    %v722 = vsub.f32 %v167, %v721
    %723 = vmatmul.mubr.f32.gmra.mrb[0].mxu0 %v722
    %v724 = vpop.f32.mrb[0].mxu0
    %v725 = vadd.f32 %v549, %v724
    %v726 = vpop.f32.mrb[0].mxu0
    %727 = vmatprep.mubr.f32.mxu0 0.0
    %v728 = vand.u32 %v170, 4294901760
    %v729 = vsub.f32 %v170, %v728
    %730 = vmatmul.mubr.f32.gmra.mrb[0].mxu0 %v729
    %v731 = vpop.f32.mrb[0].mxu0
    %v732 = vadd.f32 %v555, %v731
    %v733 = vpop.f32.mrb[0].mxu0
    %734 = vdwg.mxu0
    %735 = vmatprep.subr.mxu0 0.0
    %736 = vmatpush1.msra.mxu0 1.0
    %737 = vmatprep.subr.mxu0 0.0
    %738 = vmatpush1.msra.mxu0 1.0
    %739 = vmatprep.subr.mxu0 0.0
    %740 = vmatpush1.msra.mxu0 1.0
    %741 = vmatprep.subr.mxu0 0.0
    %742 = vmatpush1.msra.mxu0 1.0
    %743 = vmatprep.subr.mxu0 0.0
    %744 = vmatpush1.msra.mxu0 1.0
    %745 = vmatprep.subr.mxu0 0.0
    %746 = vmatpush1.msra.mxu0 1.0
    %747 = vmatprep.subr.mxu0 0.0
    %748 = vmatpush1.msra.mxu0 1.0
    %749 = vmatprep.subr.mxu0 0.0
    %750 = vmatpush1.msra.mxu0 1.0
    %751 = vmatprep.subr.mxu0 0.0
    %752 = vmatpush1.msra.mxu0 0.0
    %753 = vmatprep.subr.mxu0 0.0
    %754 = vmatpush1.msra.mxu0 0.0
    %755 = vmatprep.subr.mxu0 0.0
    %756 = vmatpush1.msra.mxu0 0.0
    %757 = vmatprep.subr.mxu0 0.0
    %758 = vmatpush1.msra.mxu0 0.0
    %759 = vmatprep.subr.mxu0 0.0
    %760 = vmatpush1.msra.mxu0 0.0
    %761 = vmatprep.subr.mxu0 0.0
    %762 = vmatpush1.msra.mxu0 0.0
    %763 = vmatprep.subr.mxu0 0.0
    %764 = vmatpush1.msra.mxu0 0.0
    %765 = vmatprep.subr.mxu0 0.0
    %766 = vmatpush1.msra.mxu0 0.0
    %767 = vmatprep.subr.mxu0 0.0
    %768 = vmatpush1.msra.mxu0 0.0
    %769 = vmatprep.subr.mxu0 0.0
    %770 = vmatpush1.msra.mxu0 0.0
    %771 = vmatprep.subr.mxu0 0.0
    %772 = vmatpush1.msra.mxu0 0.0
    %773 = vmatprep.subr.mxu0 0.0
    %774 = vmatpush1.msra.mxu0 0.0
    %775 = vmatprep.subr.mxu0 0.0
    %776 = vmatpush1.msra.mxu0 0.0
    %777 = vmatprep.subr.mxu0 0.0
    %778 = vmatpush1.msra.mxu0 0.0
    %779 = vmatprep.subr.mxu0 0.0
    %780 = vmatpush1.msra.mxu0 0.0
    %781 = vmatprep.subr.mxu0 0.0
    %782 = vmatpush1.msra.mxu0 0.0
    %783 = vmatprep.subr.mxu0 0.0
    %784 = vmatpush1.msra.mxu0 0.0
    %785 = vmatprep.subr.mxu0 0.0
    %786 = vmatpush1.msra.mxu0 0.0
    %787 = vmatprep.subr.mxu0 0.0
    %788 = vmatpush1.msra.mxu0 0.0
    %789 = vmatprep.subr.mxu0 0.0
    %790 = vmatpush1.msra.mxu0 0.0
    %791 = vmatprep.subr.mxu0 0.0
    %792 = vmatpush1.msra.mxu0 0.0
    %793 = vmatprep.subr.mxu0 0.0
    %794 = vmatpush1.msra.mxu0 0.0
    %795 = vmatprep.subr.mxu0 0.0
    %796 = vmatpush1.msra.mxu0 0.0
    %797 = vmatprep.subr.mxu0 0.0
    %798 = vmatpush1.msra.mxu0 0.0
    %799 = vmatprep.mubr.f32.mxu0 0.0
    %v800 = vand.u32 %v125, 4294901760
    %v801 = vsub.f32 %v125, %v800
    %v802 = vand.u32 %v801, 4294901760
    %803 = vmatmul.mubr.f32.gmra.mrb[0].mxu0 %v802
    %v804 = vpop.f32.mrb[0].mxu0
    %v805 = vadd.f32 %v627, %v804
    %v806 = vpop.f32.mrb[0].mxu0
    %807 = vmatprep.mubr.f32.mxu0 0.0
    %v808 = vand.u32 %v128, 4294901760
    %v809 = vsub.f32 %v128, %v808
    %v810 = vand.u32 %v809, 4294901760
    %811 = vmatmul.mubr.f32.gmra.mrb[0].mxu0 %v810
    %v812 = vpop.f32.mrb[0].mxu0
    %v813 = vadd.f32 %v634, %v812
    %v814 = vpop.f32.mrb[0].mxu0
    %815 = vmatprep.mubr.f32.mxu0 0.0
    %v816 = vand.u32 %v131, 4294901760
    %v817 = vsub.f32 %v131, %v816
    %v818 = vand.u32 %v817, 4294901760
    %819 = vmatmul.mubr.f32.gmra.mrb[0].mxu0 %v818
    %v820 = vpop.f32.mrb[0].mxu0
    %v821 = vadd.f32 %v641, %v820
    %v822 = vpop.f32.mrb[0].mxu0
    %823 = vmatprep.mubr.f32.mxu0 0.0
    %v824 = vand.u32 %v134, 4294901760
    %v825 = vsub.f32 %v134, %v824
    %v826 = vand.u32 %v825, 4294901760
    %827 = vmatmul.mubr.f32.gmra.mrb[0].mxu0 %v826
    %v828 = vpop.f32.mrb[0].mxu0
    %v829 = vadd.f32 %v648, %v828
    %v830 = vpop.f32.mrb[0].mxu0
    %831 = vmatprep.mubr.f32.mxu0 0.0
    %v832 = vand.u32 %v137, 4294901760
    %v833 = vsub.f32 %v137, %v832
    %v834 = vand.u32 %v833, 4294901760
    %835 = vmatmul.mubr.f32.gmra.mrb[0].mxu0 %v834
    %v836 = vpop.f32.mrb[0].mxu0
    %v837 = vadd.f32 %v655, %v836
    %v838 = vpop.f32.mrb[0].mxu0
    %839 = vmatprep.mubr.f32.mxu0 0.0
    %v840 = vand.u32 %v140, 4294901760
    %v841 = vsub.f32 %v140, %v840
    %v842 = vand.u32 %v841, 4294901760
    %843 = vmatmul.mubr.f32.gmra.mrb[0].mxu0 %v842
    %v844 = vpop.f32.mrb[0].mxu0
    %v845 = vadd.f32 %v662, %v844
    %v846 = vpop.f32.mrb[0].mxu0
    %847 = vmatprep.mubr.f32.mxu0 0.0
    %v848 = vand.u32 %v143, 4294901760
    %v849 = vsub.f32 %v143, %v848
    %v850 = vand.u32 %v849, 4294901760
    %851 = vmatmul.mubr.f32.gmra.mrb[0].mxu0 %v850
    %v852 = vpop.f32.mrb[0].mxu0
    %v853 = vadd.f32 %v669, %v852
    %v854 = vpop.f32.mrb[0].mxu0
    %855 = vmatprep.mubr.f32.mxu0 0.0
    %v856 = vand.u32 %v146, 4294901760
    %v857 = vsub.f32 %v146, %v856
    %v858 = vand.u32 %v857, 4294901760
    %859 = vmatmul.mubr.f32.gmra.mrb[0].mxu0 %v858
    %v860 = vpop.f32.mrb[0].mxu0
    %v861 = vadd.f32 %v676, %v860
    %v862 = vpop.f32.mrb[0].mxu0
    %863 = vmatprep.mubr.f32.mxu0 0.0
    %v864 = vand.u32 %v149, 4294901760
    %v865 = vsub.f32 %v149, %v864
    %v866 = vand.u32 %v865, 4294901760
    %867 = vmatmul.mubr.f32.gmra.mrb[0].mxu0 %v866
    %v868 = vpop.f32.mrb[0].mxu0
    %v869 = vadd.f32 %v683, %v868
    %v870 = vpop.f32.mrb[0].mxu0
    %871 = vmatprep.mubr.f32.mxu0 0.0
    %v872 = vand.u32 %v152, 4294901760
    %v873 = vsub.f32 %v152, %v872
    %v874 = vand.u32 %v873, 4294901760
    %875 = vmatmul.mubr.f32.gmra.mrb[0].mxu0 %v874
    %v876 = vpop.f32.mrb[0].mxu0
    %v877 = vadd.f32 %v690, %v876
    %v878 = vpop.f32.mrb[0].mxu0
    %879 = vmatprep.mubr.f32.mxu0 0.0
    %v880 = vand.u32 %v155, 4294901760
    %v881 = vsub.f32 %v155, %v880
    %v882 = vand.u32 %v881, 4294901760
    %883 = vmatmul.mubr.f32.gmra.mrb[0].mxu0 %v882
    %v884 = vpop.f32.mrb[0].mxu0
    %v885 = vadd.f32 %v697, %v884
    %v886 = vpop.f32.mrb[0].mxu0
    %887 = vmatprep.mubr.f32.mxu0 0.0
    %v888 = vand.u32 %v158, 4294901760
    %v889 = vsub.f32 %v158, %v888
    %v890 = vand.u32 %v889, 4294901760
    %891 = vmatmul.mubr.f32.gmra.mrb[0].mxu0 %v890
    %v892 = vpop.f32.mrb[0].mxu0
    %v893 = vadd.f32 %v704, %v892
    %v894 = vpop.f32.mrb[0].mxu0
    %895 = vmatprep.mubr.f32.mxu0 0.0
    %v896 = vand.u32 %v161, 4294901760
    %v897 = vsub.f32 %v161, %v896
    %v898 = vand.u32 %v897, 4294901760
    %899 = vmatmul.mubr.f32.gmra.mrb[0].mxu0 %v898
    %v900 = vpop.f32.mrb[0].mxu0
    %v901 = vadd.f32 %v711, %v900
    %v902 = vpop.f32.mrb[0].mxu0
    %903 = vmatprep.mubr.f32.mxu0 0.0
    %v904 = vand.u32 %v164, 4294901760
    %v905 = vsub.f32 %v164, %v904
    %v906 = vand.u32 %v905, 4294901760
    %907 = vmatmul.mubr.f32.gmra.mrb[0].mxu0 %v906
    %v908 = vpop.f32.mrb[0].mxu0
    %v909 = vadd.f32 %v718, %v908
    %v910 = vpop.f32.mrb[0].mxu0
    %911 = vmatprep.mubr.f32.mxu0 0.0
    %v912 = vand.u32 %v167, 4294901760
    %v913 = vsub.f32 %v167, %v912
    %v914 = vand.u32 %v913, 4294901760
    %915 = vmatmul.mubr.f32.gmra.mrb[0].mxu0 %v914
    %v916 = vpop.f32.mrb[0].mxu0
    %v917 = vadd.f32 %v725, %v916
    %v918 = vpop.f32.mrb[0].mxu0
    %919 = vmatprep.mubr.f32.mxu0 0.0
    %v920 = vand.u32 %v170, 4294901760
    %v921 = vsub.f32 %v170, %v920
    %v922 = vand.u32 %v921, 4294901760
    %923 = vmatmul.mubr.f32.gmra.mrb[0].mxu0 %v922
    %v924 = vpop.f32.mrb[0].mxu0
    %v925 = vadd.f32 %v732, %v924
    %v926 = vpop.f32.mrb[0].mxu0
    %927 = vdwg.mxu0
    %928 = vmatprep.subr.mxu0 0.0
    %929 = vmatpush1.msra.mxu0 0.0
    %930 = vmatprep.subr.mxu0 0.0
    %931 = vmatpush1.msra.mxu0 0.0
    %932 = vmatprep.subr.mxu0 0.0
    %933 = vmatpush1.msra.mxu0 0.0
    %934 = vmatprep.subr.mxu0 0.0
    %935 = vmatpush1.msra.mxu0 0.0
    %936 = vmatprep.subr.mxu0 0.0
    %937 = vmatpush1.msra.mxu0 0.0
    %938 = vmatprep.subr.mxu0 0.0
    %939 = vmatpush1.msra.mxu0 0.0
    %940 = vmatprep.subr.mxu0 0.0
    %941 = vmatpush1.msra.mxu0 0.0
    %942 = vmatprep.subr.mxu0 0.0
    %943 = vmatpush1.msra.mxu0 0.0
    %944 = vmatprep.subr.mxu0 0.0
    %945 = vmatpush1.msra.mxu0 0.0
    %946 = vmatprep.subr.mxu0 0.0
    %947 = vmatpush1.msra.mxu0 0.0
    %948 = vmatprep.subr.mxu0 0.0
    %949 = vmatpush1.msra.mxu0 0.0
    %950 = vmatprep.subr.mxu0 0.0
    %951 = vmatpush1.msra.mxu0 0.0
    %952 = vmatprep.subr.mxu0 0.0
    %953 = vmatpush1.msra.mxu0 0.0
    %954 = vmatprep.subr.mxu0 0.0
    %955 = vmatpush1.msra.mxu0 0.0
    %956 = vmatprep.subr.mxu0 0.0
    %957 = vmatpush1.msra.mxu0 0.0
    %958 = vmatprep.subr.mxu0 0.0
    %959 = vmatpush1.msra.mxu0 0.0
    %960 = vmatprep.subr.mxu0 0.0
    %961 = vmatpush1.msra.mxu0 0.0
    %962 = vmatprep.subr.mxu0 0.0
    %963 = vmatpush1.msra.mxu0 0.0
    %964 = vmatprep.subr.mxu0 0.0
    %965 = vmatpush1.msra.mxu0 0.0
    %966 = vmatprep.subr.mxu0 0.0
    %967 = vmatpush1.msra.mxu0 0.0
    %968 = vmatprep.subr.mxu0 0.0
    %969 = vmatpush1.msra.mxu0 0.0
    %970 = vmatprep.subr.mxu0 0.0
    %971 = vmatpush1.msra.mxu0 0.0
    %972 = vmatprep.subr.mxu0 0.0
    %973 = vmatpush1.msra.mxu0 0.0
    %974 = vmatprep.subr.mxu0 0.0
    %975 = vmatpush1.msra.mxu0 0.0
    %976 = vmatprep.subr.mxu0 0.0
    %977 = vmatpush1.msra.mxu0 0.0
    %978 = vmatprep.subr.mxu0 0.0
    %979 = vmatpush1.msra.mxu0 0.0
    %980 = vmatprep.subr.mxu0 0.0
    %981 = vmatpush1.msra.mxu0 0.0
    %982 = vmatprep.subr.mxu0 0.0
    %983 = vmatpush1.msra.mxu0 0.0
    %984 = vmatprep.subr.mxu0 0.0
    %985 = vmatpush1.msra.mxu0 0.0
    %986 = vmatprep.subr.mxu0 0.0
    %987 = vmatpush1.msra.mxu0 0.0
    %988 = vmatprep.subr.mxu0 0.0
    %989 = vmatpush1.msra.mxu0 0.0
    %990 = vmatprep.subr.mxu0 0.0
    %991 = vmatpush1.msra.mxu0 0.0
    %992 = vmatprep.mubr.f32.mxu0 0.0
    %v993 = vand.u32 %v125, 4294901760
    %994 = vmatmul.mubr.f32.gmra.mrb[0].mxu0 %v993
    %v995 = vpop.f32.mrb[0].mxu0
    %v996 = vadd.f32 %v805, %v995
    %v997 = vpop.f32.mrb[0].mxu0
    %998 = vmatprep.mubr.f32.mxu0 0.0
    %v999 = vand.u32 %v128, 4294901760
    %1000 = vmatmul.mubr.f32.gmra.mrb[0].mxu0 %v999
    %v1001 = vpop.f32.mrb[0].mxu0
    %v1002 = vadd.f32 %v813, %v1001
    %v1003 = vpop.f32.mrb[0].mxu0
    %1004 = vmatprep.mubr.f32.mxu0 0.0
    %v1005 = vand.u32 %v131, 4294901760
    %1006 = vmatmul.mubr.f32.gmra.mrb[0].mxu0 %v1005
    %v1007 = vpop.f32.mrb[0].mxu0
    %v1008 = vadd.f32 %v821, %v1007
    %v1009 = vpop.f32.mrb[0].mxu0
    %1010 = vmatprep.mubr.f32.mxu0 0.0
    %v1011 = vand.u32 %v134, 4294901760
    %1012 = vmatmul.mubr.f32.gmra.mrb[0].mxu0 %v1011
    %v1013 = vpop.f32.mrb[0].mxu0
    %v1014 = vadd.f32 %v829, %v1013
    %v1015 = vpop.f32.mrb[0].mxu0
    %1016 = vmatprep.mubr.f32.mxu0 0.0
    %v1017 = vand.u32 %v137, 4294901760
    %1018 = vmatmul.mubr.f32.gmra.mrb[0].mxu0 %v1017
    %v1019 = vpop.f32.mrb[0].mxu0
    %v1020 = vadd.f32 %v837, %v1019
    %v1021 = vpop.f32.mrb[0].mxu0
    %1022 = vmatprep.mubr.f32.mxu0 0.0
    %v1023 = vand.u32 %v140, 4294901760
    %1024 = vmatmul.mubr.f32.gmra.mrb[0].mxu0 %v1023
    %v1025 = vpop.f32.mrb[0].mxu0
    %v1026 = vadd.f32 %v845, %v1025
    %v1027 = vpop.f32.mrb[0].mxu0
    %1028 = vmatprep.mubr.f32.mxu0 0.0
    %v1029 = vand.u32 %v143, 4294901760
    %1030 = vmatmul.mubr.f32.gmra.mrb[0].mxu0 %v1029
    %v1031 = vpop.f32.mrb[0].mxu0
    %v1032 = vadd.f32 %v853, %v1031
    %v1033 = vpop.f32.mrb[0].mxu0
    %1034 = vmatprep.mubr.f32.mxu0 0.0
    %v1035 = vand.u32 %v146, 4294901760
    %1036 = vmatmul.mubr.f32.gmra.mrb[0].mxu0 %v1035
    %v1037 = vpop.f32.mrb[0].mxu0
    %v1038 = vadd.f32 %v861, %v1037
    %v1039 = vpop.f32.mrb[0].mxu0
    %1040 = vmatprep.mubr.f32.mxu0 0.0
    %v1041 = vand.u32 %v149, 4294901760
    %1042 = vmatmul.mubr.f32.gmra.mrb[0].mxu0 %v1041
    %v1043 = vpop.f32.mrb[0].mxu0
    %v1044 = vadd.f32 %v869, %v1043
    %v1045 = vpop.f32.mrb[0].mxu0
    %1046 = vmatprep.mubr.f32.mxu0 0.0
    %v1047 = vand.u32 %v152, 4294901760
    %1048 = vmatmul.mubr.f32.gmra.mrb[0].mxu0 %v1047
    %v1049 = vpop.f32.mrb[0].mxu0
    %v1050 = vadd.f32 %v877, %v1049
    %v1051 = vpop.f32.mrb[0].mxu0
    %1052 = vmatprep.mubr.f32.mxu0 0.0
    %v1053 = vand.u32 %v155, 4294901760
    %1054 = vmatmul.mubr.f32.gmra.mrb[0].mxu0 %v1053
    %v1055 = vpop.f32.mrb[0].mxu0
    %v1056 = vadd.f32 %v885, %v1055
    %v1057 = vpop.f32.mrb[0].mxu0
    %1058 = vmatprep.mubr.f32.mxu0 0.0
    %v1059 = vand.u32 %v158, 4294901760
    %1060 = vmatmul.mubr.f32.gmra.mrb[0].mxu0 %v1059
    %v1061 = vpop.f32.mrb[0].mxu0
    %v1062 = vadd.f32 %v893, %v1061
    %v1063 = vpop.f32.mrb[0].mxu0
    %1064 = vmatprep.mubr.f32.mxu0 0.0
    %v1065 = vand.u32 %v161, 4294901760
    %1066 = vmatmul.mubr.f32.gmra.mrb[0].mxu0 %v1065
    %v1067 = vpop.f32.mrb[0].mxu0
    %v1068 = vadd.f32 %v901, %v1067
    %v1069 = vpop.f32.mrb[0].mxu0
    %1070 = vmatprep.mubr.f32.mxu0 0.0
    %v1071 = vand.u32 %v164, 4294901760
    %1072 = vmatmul.mubr.f32.gmra.mrb[0].mxu0 %v1071
    %v1073 = vpop.f32.mrb[0].mxu0
    %v1074 = vadd.f32 %v909, %v1073
    %v1075 = vpop.f32.mrb[0].mxu0
    %1076 = vmatprep.mubr.f32.mxu0 0.0
    %v1077 = vand.u32 %v167, 4294901760
    %1078 = vmatmul.mubr.f32.gmra.mrb[0].mxu0 %v1077
    %v1079 = vpop.f32.mrb[0].mxu0
    %v1080 = vadd.f32 %v917, %v1079
    %v1081 = vpop.f32.mrb[0].mxu0
    %1082 = vmatprep.mubr.f32.mxu0 0.0
    %v1083 = vand.u32 %v170, 4294901760
    %1084 = vmatmul.mubr.f32.gmra.mrb[0].mxu0 %v1083
    %v1085 = vpop.f32.mrb[0].mxu0
    %v1086 = vadd.f32 %v925, %v1085
    %v1087 = vpop.f32.mrb[0].mxu0
    %1088 = vdwg.mxu0
    %1089 = vmatprep.subr.mxu0 0.0
    %1090 = vmatpush1.msra.mxu0 1.0
    %1091 = vmatprep.subr.mxu0 0.0
    %1092 = vmatpush1.msra.mxu0 1.0
    %1093 = vmatprep.subr.mxu0 0.0
    %1094 = vmatpush1.msra.mxu0 1.0
    %1095 = vmatprep.subr.mxu0 0.0
    %1096 = vmatpush1.msra.mxu0 1.0
    %1097 = vmatprep.subr.mxu0 0.0
    %1098 = vmatpush1.msra.mxu0 1.0
    %1099 = vmatprep.subr.mxu0 0.0
    %1100 = vmatpush1.msra.mxu0 1.0
    %1101 = vmatprep.subr.mxu0 0.0
    %1102 = vmatpush1.msra.mxu0 1.0
    %1103 = vmatprep.subr.mxu0 0.0
    %1104 = vmatpush1.msra.mxu0 1.0
    %1105 = vmatprep.subr.mxu0 0.0
    %1106 = vmatpush1.msra.mxu0 0.0
    %1107 = vmatprep.subr.mxu0 0.0
    %1108 = vmatpush1.msra.mxu0 0.0
    %1109 = vmatprep.subr.mxu0 0.0
    %1110 = vmatpush1.msra.mxu0 0.0
    %1111 = vmatprep.subr.mxu0 0.0
    %1112 = vmatpush1.msra.mxu0 0.0
    %1113 = vmatprep.subr.mxu0 0.0
    %1114 = vmatpush1.msra.mxu0 0.0
    %1115 = vmatprep.subr.mxu0 0.0
    %1116 = vmatpush1.msra.mxu0 0.0
    %1117 = vmatprep.subr.mxu0 0.0
    %1118 = vmatpush1.msra.mxu0 0.0
    %1119 = vmatprep.subr.mxu0 0.0
    %1120 = vmatpush1.msra.mxu0 0.0
    %1121 = vmatprep.subr.mxu0 0.0
    %1122 = vmatpush1.msra.mxu0 0.0
    %1123 = vmatprep.subr.mxu0 0.0
    %1124 = vmatpush1.msra.mxu0 0.0
    %1125 = vmatprep.subr.mxu0 0.0
    %1126 = vmatpush1.msra.mxu0 0.0
    %1127 = vmatprep.subr.mxu0 0.0
    %1128 = vmatpush1.msra.mxu0 0.0
    %1129 = vmatprep.subr.mxu0 0.0
    %1130 = vmatpush1.msra.mxu0 0.0
    %1131 = vmatprep.subr.mxu0 0.0
    %1132 = vmatpush1.msra.mxu0 0.0
    %1133 = vmatprep.subr.mxu0 0.0
    %1134 = vmatpush1.msra.mxu0 0.0
    %1135 = vmatprep.subr.mxu0 0.0
    %1136 = vmatpush1.msra.mxu0 0.0
    %1137 = vmatprep.subr.mxu0 0.0
    %1138 = vmatpush1.msra.mxu0 0.0
    %1139 = vmatprep.subr.mxu0 0.0
    %1140 = vmatpush1.msra.mxu0 0.0
    %1141 = vmatprep.subr.mxu0 0.0
    %1142 = vmatpush1.msra.mxu0 0.0
    %1143 = vmatprep.subr.mxu0 0.0
    %1144 = vmatpush1.msra.mxu0 0.0
    %1145 = vmatprep.subr.mxu0 0.0
    %1146 = vmatpush1.msra.mxu0 0.0
    %1147 = vmatprep.subr.mxu0 0.0
    %1148 = vmatpush1.msra.mxu0 0.0
    %1149 = vmatprep.subr.mxu0 0.0
    %1150 = vmatpush1.msra.mxu0 0.0
    %1151 = vmatprep.subr.mxu0 0.0
    %1152 = vmatpush1.msra.mxu0 0.0
    %1153 = vmatprep.mubr.f32.mxu0 0.0
    %v1154 = vand.u32 %v125, 4294901760
    %1155 = vmatmul.mubr.f32.gmra.mrb[0].mxu0 %v1154
    %v1156 = vpop.f32.mrb[0].mxu0
    %v1157 = vadd.f32 %v996, %v1156
    %v1158 = vpop.f32.mrb[0].mxu0
    %1159 = vmatprep.mubr.f32.mxu0 0.0
    %v1160 = vand.u32 %v128, 4294901760
    %1161 = vmatmul.mubr.f32.gmra.mrb[0].mxu0 %v1160
    %v1162 = vpop.f32.mrb[0].mxu0
    %v1163 = vadd.f32 %v1002, %v1162
    %v1164 = vpop.f32.mrb[0].mxu0
    %1165 = vmatprep.mubr.f32.mxu0 0.0
    %v1166 = vand.u32 %v131, 4294901760
    %1167 = vmatmul.mubr.f32.gmra.mrb[0].mxu0 %v1166
    %v1168 = vpop.f32.mrb[0].mxu0
    %v1169 = vadd.f32 %v1008, %v1168
    %v1170 = vpop.f32.mrb[0].mxu0
    %1171 = vmatprep.mubr.f32.mxu0 0.0
    %v1172 = vand.u32 %v134, 4294901760
    %1173 = vmatmul.mubr.f32.gmra.mrb[0].mxu0 %v1172
    %v1174 = vpop.f32.mrb[0].mxu0
    %v1175 = vadd.f32 %v1014, %v1174
    %v1176 = vpop.f32.mrb[0].mxu0
    %1177 = vmatprep.mubr.f32.mxu0 0.0
    %v1178 = vand.u32 %v137, 4294901760
    %1179 = vmatmul.mubr.f32.gmra.mrb[0].mxu0 %v1178
    %v1180 = vpop.f32.mrb[0].mxu0
    %v1181 = vadd.f32 %v1020, %v1180
    %v1182 = vpop.f32.mrb[0].mxu0
    %1183 = vmatprep.mubr.f32.mxu0 0.0
    %v1184 = vand.u32 %v140, 4294901760
    %1185 = vmatmul.mubr.f32.gmra.mrb[0].mxu0 %v1184
    %v1186 = vpop.f32.mrb[0].mxu0
    %v1187 = vadd.f32 %v1026, %v1186
    %v1188 = vpop.f32.mrb[0].mxu0
    %1189 = vmatprep.mubr.f32.mxu0 0.0
    %v1190 = vand.u32 %v143, 4294901760
    %1191 = vmatmul.mubr.f32.gmra.mrb[0].mxu0 %v1190
    %v1192 = vpop.f32.mrb[0].mxu0
    %v1193 = vadd.f32 %v1032, %v1192
    %v1194 = vpop.f32.mrb[0].mxu0
    %1195 = vmatprep.mubr.f32.mxu0 0.0
    %v1196 = vand.u32 %v146, 4294901760
    %1197 = vmatmul.mubr.f32.gmra.mrb[0].mxu0 %v1196
    %v1198 = vpop.f32.mrb[0].mxu0
    %v1199 = vadd.f32 %v1038, %v1198
    %v1200 = vpop.f32.mrb[0].mxu0
    %1201 = vmatprep.mubr.f32.mxu0 0.0
    %v1202 = vand.u32 %v149, 4294901760
    %1203 = vmatmul.mubr.f32.gmra.mrb[0].mxu0 %v1202
    %v1204 = vpop.f32.mrb[0].mxu0
    %v1205 = vadd.f32 %v1044, %v1204
    %v1206 = vpop.f32.mrb[0].mxu0
    %1207 = vmatprep.mubr.f32.mxu0 0.0
    %v1208 = vand.u32 %v152, 4294901760
    %1209 = vmatmul.mubr.f32.gmra.mrb[0].mxu0 %v1208
    %v1210 = vpop.f32.mrb[0].mxu0
    %v1211 = vadd.f32 %v1050, %v1210
    %v1212 = vpop.f32.mrb[0].mxu0
    %1213 = vmatprep.mubr.f32.mxu0 0.0
    %v1214 = vand.u32 %v155, 4294901760
    %1215 = vmatmul.mubr.f32.gmra.mrb[0].mxu0 %v1214
    %v1216 = vpop.f32.mrb[0].mxu0
    %v1217 = vadd.f32 %v1056, %v1216
    %v1218 = vpop.f32.mrb[0].mxu0
    %1219 = vmatprep.mubr.f32.mxu0 0.0
    %v1220 = vand.u32 %v158, 4294901760
    %1221 = vmatmul.mubr.f32.gmra.mrb[0].mxu0 %v1220
    %v1222 = vpop.f32.mrb[0].mxu0
    %v1223 = vadd.f32 %v1062, %v1222
    %v1224 = vpop.f32.mrb[0].mxu0
    %1225 = vmatprep.mubr.f32.mxu0 0.0
    %v1226 = vand.u32 %v161, 4294901760
    %1227 = vmatmul.mubr.f32.gmra.mrb[0].mxu0 %v1226
    %v1228 = vpop.f32.mrb[0].mxu0
    %v1229 = vadd.f32 %v1068, %v1228
    %v1230 = vpop.f32.mrb[0].mxu0
    %1231 = vmatprep.mubr.f32.mxu0 0.0
    %v1232 = vand.u32 %v164, 4294901760
    %1233 = vmatmul.mubr.f32.gmra.mrb[0].mxu0 %v1232
    %v1234 = vpop.f32.mrb[0].mxu0
    %v1235 = vadd.f32 %v1074, %v1234
    %v1236 = vpop.f32.mrb[0].mxu0
    %1237 = vmatprep.mubr.f32.mxu0 0.0
    %v1238 = vand.u32 %v167, 4294901760
    %1239 = vmatmul.mubr.f32.gmra.mrb[0].mxu0 %v1238
    %v1240 = vpop.f32.mrb[0].mxu0
    %v1241 = vadd.f32 %v1080, %v1240
    %v1242 = vpop.f32.mrb[0].mxu0
    %1243 = vmatprep.mubr.f32.mxu0 0.0
    %v1244 = vand.u32 %v170, 4294901760
    %1245 = vmatmul.mubr.f32.gmra.mrb[0].mxu0 %v1244
    %v1246 = vpop.f32.mrb[0].mxu0
    %v1247 = vadd.f32 %v1086, %v1246
    %v1248 = vpop.f32.mrb[0].mxu0
    %1249 = vdwg.mxu0
    %1250 = vxpose.xlu0.b32.start [1/16] %v1157, 128
    %1251 = vxpose.xlu0.b32.cont [2/16] %v1163, 128
    %1252 = vxpose.xlu0.b32.cont [3/16] %v1169, 128
    %1253 = vxpose.xlu0.b32.cont [4/16] %v1175, 128
    %1254 = vxpose.xlu0.b32.cont [5/16] %v1181, 128
    %1255 = vxpose.xlu0.b32.cont [6/16] %v1187, 128
    %1256 = vxpose.xlu0.b32.cont [7/16] %v1193, 128
    %1257 = vxpose.xlu0.b32.cont [8/16] %v1199, 128
    %1258 = vxpose.xlu0.b32.cont [9/16] %v1205, 128
    %1259 = vxpose.xlu0.b32.cont [10/16] %v1211, 128
    %1260 = vxpose.xlu0.b32.cont [11/16] %v1217, 128
    %1261 = vxpose.xlu0.b32.cont [12/16] %v1223, 128
    %1262 = vxpose.xlu0.b32.cont [13/16] %v1229, 128
    %1263 = vxpose.xlu0.b32.cont [14/16] %v1235, 128
    %1264 = vxpose.xlu0.b32.cont [15/16] %v1241, 128
    %1265 = vxpose.xlu0.b32.end [16/16] %v1247, 128
    %v1266 = vpop.trf.xlu0
    %v1267 = vpop.trf.xlu0
    %v1268 = vpop.trf.xlu0
    %v1269 = vpop.trf.xlu0
    %v1270 = vpop.trf.xlu0
    %v1271 = vpop.trf.xlu0
    %v1272 = vpop.trf.xlu0
    %v1273 = vpop.trf.xlu0
    %v1274 = vpop.trf.xlu0
    %v1275 = vpop.trf.xlu0
    %v1276 = vpop.trf.xlu0
    %v1277 = vpop.trf.xlu0
    %v1278 = vpop.trf.xlu0
    %v1279 = vpop.trf.xlu0
    %v1280 = vpop.trf.xlu0
    %v1281 = vpop.trf.xlu0
    %v1282 = vrsqrt.pop %v1266
    %v1283 = vmul.f32 %v1266, %v1282
    %vm1284 = vcmp.eq.f32.partialorder %v1266, inf
    %v1285 = vsel %vm1284, %v1266, %v1283
    %vm1286 = vcmp.eq.f32.partialorder %v1266, 0.0
    %v1287 = vand.u32 %v1266, 2147483648
    %v1288 = vsel %vm1286, %v1287, %v1285
    %v1289 = vld [vmem:[%s2] sm:$0x1]
    %v1290 = vadd.f32 %v1288, 0.0001
    %v1291 = vsub.f32 15.0, %v1290
    %v1292 = vmax.f32 %v1291, 0.0
    %v1293 = vsub.f32 1.0, %v1289
    %v1294 = vmul.f32 %v1293, %v1288
    %v1295 = vmul.f32 %v1289, %v1292
    %v1296 = vadd.f32 %v1294, %v1295
    %v1297 = vmul.f32 %v1296, 0.5
    %1298 = vst [vmem:[#allocation7] sm:$0x1] %v1297
    // Predicated region
    $region22: #{tpu_custom_call.1} parent=1 // pred_check
      _
    $region23: #{tpu_custom_call.1} parent=1 // pred_check_branch
      %1300 = sbr.rel (0) target = $region25
    $region24: #{tpu_custom_call.1} parent=1 // pred_region
      %s1302 = ssub.s32 16, 16
      %1303 = vsyncadd [#allocation4], %s1302
      %s1305 = sshll.u32 [#allocation7], 4
      %s1306 = int_to_ptr.vmem [resolvable:$true] %s1305
      %1308 = dma.vmem_to_hbm [thread:$0]  %s1306, 16, %s3, [#allocation4]
    $region25: #{tpu_custom_call.1} parent=1 // pred_fallthru
      _
    // Predicated region
    $region26: #{tpu_custom_call.1} parent=1 // pred_check
      _
    $region27: #{tpu_custom_call.1} parent=1 // pred_check_branch
      %1310 = sbr.rel (0) target = $region29
    $region28: #{tpu_custom_call.1} parent=1 // pred_region
      %1311 = dma.done [#allocation4], 16
    $region29: #{tpu_custom_call.1} parent=1 // pred_fallthru
      _
    %1312 = vsyncpa [#allocation3], 1
    %1313 = vsyncpa [#allocation6], 1
    %1314 = vsyncpa [#allocation4], 1

</llo_original>
